<compile_context>
chip_gen: v6e
topology: v6e:2x2x1
jax: 0.10.0
libtpu: 0.0.40
codegen_flags: <defaults>
</compile_context>

<pallas_src>
import functools

import jax
import jax.numpy as jnp
from jax.experimental import pallas as pl
from jax.experimental.pallas import tpu as pltpu


def _round_up(n: int, m: int) -> int:
    return ((n + m - 1) // m) * m


def _vmem_capacity_bytes() -> int:
    try:
        return int(pltpu.get_tpu_info().vmem_capacity_bytes)
    except Exception:
        return 64 * 1024 * 1024  # conservative fallback (v7x per-TC)


def _ffn_kernel(x_ref, w1_ref, b1_ref, w2_ref, b2_ref, o_ref, acc_ref):
    # x_ref:  (tile_m, d_model_p)   input dtype (f32 or bf16)
    # w1_ref: (d_model_p, tile_ff)  bf16    b1_ref: (1, tile_ff)    f32
    # w2_ref: (tile_ff, d_model_p)  bf16    b2_ref: (1, d_model_p)  f32
    # o_ref:  (tile_m, d_model_p)   out dtype
    # acc_ref:(tile_m, d_model_p)   f32 accumulator scratch
    j = pl.program_id(1)

    @pl.when(j == 0)
    def _():
        acc_ref[...] = jnp.zeros_like(acc_ref)

    x = x_ref[...].astype(w1_ref.dtype)            # in-kernel cast (VPU, hidden under MXU)
    h = jnp.dot(x, w1_ref[...], preferred_element_type=jnp.float32)
    h = jnp.maximum(h + b1_ref[...], 0.0)          # bias + ReLU in f32
    # dropout (eval mode) == identity
    acc_ref[...] += jnp.dot(h.astype(w2_ref.dtype), w2_ref[...],
                            preferred_element_type=jnp.float32)

    @pl.when(j == pl.num_programs(1) - 1)
    def _():
        o_ref[...] = (acc_ref[...] + b2_ref[...]).astype(o_ref.dtype)


@functools.partial(jax.jit,
                   static_argnames=("tile_m", "tile_ff", "compute_dtype", "out_dtype"))
def positionwise_feed_forward(x, w1, b1, w2, b2, *, tile_m=None, tile_ff=None,
                              compute_dtype=jnp.bfloat16, out_dtype=None):
    """x: (B, S, d_model); w1: (d_model, d_ff); w2: (d_ff, d_model)."""
    B, S, d_model = x.shape
    d_ff = w1.shape[1]
    M = B * S
    out_dtype = x.dtype if out_dtype is None else out_dtype

    cbytes = jnp.dtype(compute_dtype).itemsize
    obytes = jnp.dtype(out_dtype).itemsize
    xbytes = jnp.dtype(x.dtype).itemsize

    # ---- lane-dense feature geometry -----------------------------------
    d_model_p = _round_up(d_model, 128)
    d_ff_p = _round_up(d_ff, 128)

    # ---- static tile selection ------------------------------------------
    if tile_ff is None:
        tile_ff = min(2048, d_ff_p)
    tile_ff = min(_round_up(int(tile_ff), 128), d_ff_p)

    if tile_m is None:
        tile_m = 256 if d_ff_p >= 8192 else 512     # big d_ff -> smaller row tile
    # give both v7x TensorCores a row tile when M allows (>= 2 "parallel" steps)
    tile_m = min(int(tile_m), max(16, _round_up(-(-M // 2), 16)))
    tile_m = _round_up(max(tile_m, 16), 16)         # bf16 sublane packing

    # ---- generation-aware VMEM budget; shrink tiles, don't clamp below need
    capacity = _vmem_capacity_bytes()
    budget = (capacity * 17) // 20                  # ~85% of per-core VMEM

    def per_step_vmem(tm, tf):
        return (2 * tm * d_model_p * xbytes         # x tile (double-buffered)
                + tm * d_model_p * cbytes           # in-kernel bf16 copy of x
                + 2 * d_model_p * tf * cbytes       # W1 slice (double-buffered)
                + 2 * tf * d_model_p * cbytes       # W2 slice (double-buffered)
                + 2 * (tf + d_model_p) * 4          # b1, b2 (double-buffered)
                + 2 * tm * d_model_p * obytes       # out tile (double-buffered)
                + tm * d_model_p * 4                # f32 accumulator scratch
                + tm * tf * 4                       # f32 h
                + tm * tf * cbytes)                 # bf16 copy of h for 2nd dot

    while per_step_vmem(tile_m, tile_ff) > budget and tile_ff > 256:
        tile_ff = max(256, _round_up(tile_ff // 2, 128))
    while per_step_vmem(tile_m, tile_ff) > budget and tile_m > 64:
        tile_m = max(64, _round_up(tile_m // 2, 16))

    d_ff_p = _round_up(d_ff_p, tile_ff)             # make d_ff a multiple of tile_ff
    M_p = _round_up(M, tile_m)
    grid_m = M_p // tile_m
    grid_ff = d_ff_p // tile_ff

    vmem_needed = per_step_vmem(tile_m, tile_ff)
    vmem_limit = int(min(max(vmem_needed * 3 // 2, 16 * 1024 * 1024), capacity))

    # ---- operand prep (zero padding is inert for this FFN) --------------
    x2d = x.reshape(M, d_model)
    if (M_p != M) or (d_model_p != d_model):
        # padded copy is unavoidable here; fuse the bf16 cast into it
        x2d = jnp.pad(x2d, ((0, M_p - M), (0, d_model_p - d_model))).astype(compute_dtype)
    # else: pass x through in its original dtype; the kernel casts on the VPU

    w1_p = jnp.pad(w1, ((0, d_model_p - d_model),
                        (0, d_ff_p - d_ff))).astype(compute_dtype)
    w2_p = jnp.pad(w2, ((0, d_ff_p - d_ff),
                        (0, d_model_p - d_model))).astype(compute_dtype)
    b1_p = jnp.pad(b1, (0, d_ff_p - d_ff)).reshape(1, d_ff_p).astype(jnp.float32)
    b2_p = jnp.pad(b2, (0, d_model_p - d_model)).reshape(1, d_model_p).astype(jnp.float32)

    # ---- advisory cost estimate ------------------------------------------
    cost = pl.CostEstimate(
        flops=2 * 2 * M_p * d_model_p * d_ff_p,                    # two matmuls
        transcendentals=0,
        bytes_accessed=(M_p * d_model_p * (x2d.dtype.itemsize + obytes)   # x in, y out
                        + grid_m * 2 * d_model_p * d_ff_p * cbytes        # weights / row tile
                        + grid_m * (d_ff_p + d_model_p) * 4),             # biases
    )

    out2d = pl.pallas_call(
        _ffn_kernel,
        out_shape=jax.ShapeDtypeStruct((M_p, d_model_p), out_dtype),
        grid_spec=pltpu.PrefetchScalarGridSpec(
            num_scalar_prefetch=0,
            grid=(grid_m, grid_ff),
            in_specs=[
                pl.BlockSpec((tile_m, d_model_p), lambda i, j: (i, 0)),   # x rows
                pl.BlockSpec((d_model_p, tile_ff), lambda i, j: (0, j)),  # W1 slice
                pl.BlockSpec((1, tile_ff), lambda i, j: (0, j)),          # b1 slice
                pl.BlockSpec((tile_ff, d_model_p), lambda i, j: (j, 0)),  # W2 slice
                pl.BlockSpec((1, d_model_p), lambda i, j: (0, 0)),        # b2
            ],
            out_specs=pl.BlockSpec((tile_m, d_model_p), lambda i, j: (i, 0)),
            scratch_shapes=[pltpu.VMEM((tile_m, d_model_p), jnp.float32)],
        ),
        compiler_params=pltpu.CompilerParams(
            dimension_semantics=("parallel", "arbitrary"),
            vmem_limit_bytes=vmem_limit),
        cost_estimate=cost,
    )(x2d, w1_p, b1_p, w2_p, b2_p)

    # strip padding
    if (M_p != M) or (d_model_p != d_model):
        out2d = out2d[:M, :d_model]
    return out2d.reshape(B, S, d_model)


if __name__ == "__main__":
    # Small, deterministic setup.
    B, S = 2, 8
    d_model, d_ff = 32, 64

    key = jax.random.PRNGKey(0)
    kx, kw1, kb1, kw2, kb2 = jax.random.split(key, 5)

    x = jax.random.normal(kx, (B, S, d_model), dtype=jnp.float32)

    # nn.Linear(d_model, d_ff): weight (d_ff, d_model), bias (d_ff,).
    # We store transposed weights (in, out) for the kernel.
    bound1 = 1.0 / (d_model ** 0.5)
    w1 = jax.random.uniform(kw1, (d_model, d_ff), minval=-bound1, maxval=bound1,
                            dtype=jnp.float32)
    b1 = jax.random.uniform(kb1, (d_ff,), minval=-bound1, maxval=bound1,
                            dtype=jnp.float32)
    bound2 = 1.0 / (d_ff ** 0.5)
    w2 = jax.random.uniform(kw2, (d_ff, d_model), minval=-bound2, maxval=bound2,
                            dtype=jnp.float32)
    b2 = jax.random.uniform(kb2, (d_model,), minval=-bound2, maxval=bound2,
                            dtype=jnp.float32)

    out = positionwise_feed_forward(x, w1, b1, w2, b2)
    out = jax.block_until_ready(out)
    assert out.shape == (B, S, d_model)

    # Tight reference with the same bf16-input / f32-accumulate recipe.
    xb = x.astype(jnp.bfloat16).astype(jnp.float32)
    w1b = w1.astype(jnp.bfloat16).astype(jnp.float32)
    w2b = w2.astype(jnp.bfloat16).astype(jnp.float32)
    with jax.default_matmul_precision("highest"):
        h_ref = jnp.maximum(xb @ w1b + b1, 0.0)
        ref = h_ref.astype(jnp.bfloat16).astype(jnp.float32) @ w2b + b2
    assert jnp.allclose(out, ref, atol=1e-4, rtol=1e-4)

    # Loose sanity check vs. the pure-f32 PyTorch-equivalent math
    # (eval-mode dropout == identity); bf16 matmul inputs cost a little accuracy.
    ref_f32 = jnp.maximum(x @ w1 + b1, 0.0) @ w2 + b2
    assert jnp.allclose(out, ref_f32, atol=5e-2, rtol=5e-2)

    print("KERNEL_OK")
</pallas_src>

<mosaic_0001>
module attributes {stable_mosaic.version = 11 : i64} {
  func.func @_ffn_kernel(%arg0: i32, %arg1: i32, %arg2: memref<16x128xbf16, #tpu.memory_space<vmem>>, %arg3: memref<128x128xbf16, #tpu.memory_space<vmem>>, %arg4: memref<1x128xf32, #tpu.memory_space<vmem>>, %arg5: memref<128x128xbf16, #tpu.memory_space<vmem>>, %arg6: memref<1x128xf32, #tpu.memory_space<vmem>>, %arg7: memref<16x128xf32, #tpu.memory_space<vmem>>, %arg8: memref<16x128xf32, #tpu.memory_space<vmem>>) attributes {dimension_semantics = [#tpu.dimension_semantics<parallel>, #tpu.dimension_semantics<arbitrary>], iteration_bounds = array<i64: 1, 1>, scalar_prefetch = 0 : i64, scratch_operands = 1 : i64, tpu.core_type = #tpu.core_type<tc>, window_params = [{transform_indices = @transform_0, window_bounds = array<i64: 16, 128>}, {transform_indices = @transform_1, window_bounds = array<i64: 128, 128>}, {transform_indices = @transform_2, window_bounds = array<i64: 1, 128>}, {transform_indices = @transform_3, window_bounds = array<i64: 128, 128>}, {pipeline_mode = #tpu.pipeline_mode<synchronous>, transform_indices = @transform_4, window_bounds = array<i64: 1, 128>}, {transform_indices = @transform_5, window_bounds = array<i64: 16, 128>}]} {
    %c0_i32 = arith.constant 0 : i32
    %0 = arith.cmpi eq, %arg1, %c0_i32 : i32
    %1 = arith.extui %0 : i1 to i32
    %c0_i32_0 = arith.constant 0 : i32
    %2 = arith.cmpi ne, %1, %c0_i32_0 : i32
    scf.if %2 {
      %cst_16 = arith.constant 0.000000e+00 : f32
      %20 = vector.broadcast %cst_16 : f32 to vector<16x128xf32>
      %c0_17 = arith.constant 0 : index
      %c0_18 = arith.constant 0 : index
      %21 = vector.load %arg8[%c0_17, %c0_18] : memref<16x128xf32, #tpu.memory_space<vmem>>, vector<16x128xf32>
      tpu.vector_store %arg8[%c0_17, %c0_18], %20 {strides = array<i32>} : memref<16x128xf32, #tpu.memory_space<vmem>>, vector<16x128xf32>,
    } else {
    }
    %c0 = arith.constant 0 : index
    %c0_1 = arith.constant 0 : index
    %3 = vector.load %arg2[%c0, %c0_1] : memref<16x128xbf16, #tpu.memory_space<vmem>>, vector<16x128xbf16>
    %c0_2 = arith.constant 0 : index
    %c0_3 = arith.constant 0 : index
    %4 = vector.load %arg3[%c0_2, %c0_3] : memref<128x128xbf16, #tpu.memory_space<vmem>>, vector<128x128xbf16>
    %cst = arith.constant dense<0.000000e+00> : vector<16x128xf32>
    %5 = tpu.matmul %3, %4, %cst {dimension_numbers = #tpu.dot_dimension_numbers<[1], [0], [0], [1], [0, 0, 1, 1], [], []>} : vector<16x128xbf16>, vector<128x128xbf16>, vector<16x128xf32> -> vector<16x128xf32>
    %c0_4 = arith.constant 0 : index
    %c0_5 = arith.constant 0 : index
    %6 = vector.load %arg4[%c0_4, %c0_5] : memref<1x128xf32, #tpu.memory_space<vmem>>, vector<1x128xf32>
    %7 = vector.broadcast %6 : vector<1x128xf32> to vector<16x128xf32>
    %8 = arith.addf %5, %7 : vector<16x128xf32>
    %cst_6 = arith.constant 0.000000e+00 : f32
    %9 = vector.broadcast %cst_6 : f32 to vector<16x128xf32>
    %10 = arith.maximumf %8, %9 : vector<16x128xf32>
    %c0_7 = arith.constant 0 : index
    %c0_8 = arith.constant 0 : index
    %11 = vector.load %arg8[%c0_7, %c0_8] : memref<16x128xf32, #tpu.memory_space<vmem>>, vector<16x128xf32>
    %12 = arith.truncf %10 : vector<16x128xf32> to vector<16x128xbf16>
    %c0_9 = arith.constant 0 : index
    %c0_10 = arith.constant 0 : index
    %13 = vector.load %arg5[%c0_9, %c0_10] : memref<128x128xbf16, #tpu.memory_space<vmem>>, vector<128x128xbf16>
    %cst_11 = arith.constant dense<0.000000e+00> : vector<16x128xf32>
    %14 = tpu.matmul %12, %13, %cst_11 {dimension_numbers = #tpu.dot_dimension_numbers<[1], [0], [0], [1], [0, 0, 1, 1], [], []>} : vector<16x128xbf16>, vector<128x128xbf16>, vector<16x128xf32> -> vector<16x128xf32>
    %15 = arith.addf %11, %14 : vector<16x128xf32>
    %c0_12 = arith.constant 0 : index
    %c0_13 = arith.constant 0 : index
    %16 = vector.load %arg8[%c0_12, %c0_13] : memref<16x128xf32, #tpu.memory_space<vmem>>, vector<16x128xf32>
    tpu.vector_store %arg8[%c0_12, %c0_13], %15 {strides = array<i32>} : memref<16x128xf32, #tpu.memory_space<vmem>>, vector<16x128xf32>,
    %c0_i32_14 = arith.constant 0 : i32
    %17 = arith.cmpi eq, %arg1, %c0_i32_14 : i32
    %18 = arith.extui %17 : i1 to i32
    %c0_i32_15 = arith.constant 0 : i32
    %19 = arith.cmpi ne, %18, %c0_i32_15 : i32
    scf.if %19 {
      %c0_16 = arith.constant 0 : index
      %c0_17 = arith.constant 0 : index
      %20 = vector.load %arg8[%c0_16, %c0_17] : memref<16x128xf32, #tpu.memory_space<vmem>>, vector<16x128xf32>
      %c0_18 = arith.constant 0 : index
      %c0_19 = arith.constant 0 : index
      %21 = vector.load %arg6[%c0_18, %c0_19] : memref<1x128xf32, #tpu.memory_space<vmem>>, vector<1x128xf32>
      %22 = vector.broadcast %21 : vector<1x128xf32> to vector<16x128xf32>
      %23 = arith.addf %20, %22 : vector<16x128xf32>
      %c0_20 = arith.constant 0 : index
      %c0_21 = arith.constant 0 : index
      %24 = vector.load %arg7[%c0_20, %c0_21] : memref<16x128xf32, #tpu.memory_space<vmem>>, vector<16x128xf32>
      tpu.vector_store %arg7[%c0_20, %c0_21], %23 {strides = array<i32>} : memref<16x128xf32, #tpu.memory_space<vmem>>, vector<16x128xf32>,
    } else {
    }
    return
  }
  func.func @transform_0(%arg0: i32, %arg1: i32) -> (i32, i32) {
    %c0_i32 = arith.constant 0 : i32
    %c0_i32_0 = arith.constant 0 : i32
    return %arg0, %c0_i32 : i32, i32
  }
  func.func @transform_1(%arg0: i32, %arg1: i32) -> (i32, i32) {
    %c0_i32 = arith.constant 0 : i32
    %c0_i32_0 = arith.constant 0 : i32
    return %c0_i32, %arg1 : i32, i32
  }
  func.func @transform_2(%arg0: i32, %arg1: i32) -> (i32, i32) {
    %c0_i32 = arith.constant 0 : i32
    %c0_i32_0 = arith.constant 0 : i32
    return %c0_i32, %arg1 : i32, i32
  }
  func.func @transform_3(%arg0: i32, %arg1: i32) -> (i32, i32) {
    %c0_i32 = arith.constant 0 : i32
    %c0_i32_0 = arith.constant 0 : i32
    return %arg1, %c0_i32 : i32, i32
  }
  func.func @transform_4(%arg0: i32, %arg1: i32) -> (i32, i32) {
    %c0_i32 = arith.constant 0 : i32
    %c0_i32_0 = arith.constant 0 : i32
    %c0_i32_1 = arith.constant 0 : i32
    return %c0_i32, %c0_i32_0 : i32, i32
  }
  func.func @transform_5(%arg0: i32, %arg1: i32) -> (i32, i32) {
    %c0_i32 = arith.constant 0 : i32
    %c0_i32_0 = arith.constant 0 : i32
    return %arg0, %c0_i32 : i32, i32
  }
}

</mosaic_0001>

<llo_original>
// kernel: positionwise_feed_forward.1
$region0: #{positionwise_feed_forward.1}
  #allocation0 [shape = 'u32[]', space=smem, size = 0x4, offset = 0x4, fixed_abs, tag = 'smem constant byte address 0x4 - core index']
  #allocation1 [shape = 'u32[144,128]{1,0:T(1,128)}', space=vmem, size = 0x12000, scoped, tag = 'internal scratch']
  #allocation2 [shape = 'f32[16,128]{1,0:T(8,128)}', space=vmem, size = 0x2000, scoped, tag = 'scratch operand']
  %s0 = inlined_call_operand.vmem [shape: bf16[16,128], index: 0, kind: input, shape index: {}]
  %s1 = inlined_call_operand.vmem [shape: bf16[128,128], index: 1, kind: input, shape index: {}]
  %s2 = inlined_call_operand.vmem [shape: f32[1,128], index: 2, kind: input, shape index: {}]
  %s3 = inlined_call_operand.vmem [shape: bf16[128,128], index: 3, kind: input, shape index: {}]
  %s4 = inlined_call_operand.vmem [shape: f32[1,128], index: 4, kind: input, shape index: {}]
  %s5 = inlined_call_operand.vmem [shape: f32[16,128], index: 5, kind: output, shape index: {}]
  %s6 = sld [smem:[#allocation0]]
  $region38: #{positionwise_feed_forward.1} parent=0
    _
  %s8 = ssub.s32 1, %s6
  %s9 = scalar_select 0, %s8, %s6
  // Predicated region
  $region2: #{positionwise_feed_forward.1} parent=0 // pred_check
    _
  $region3: #{positionwise_feed_forward.1} parent=0 // pred_check_branch
    %11 = sbr.rel (0) target = $region5
  $region4: #{positionwise_feed_forward.1} parent=0 // pred_region
    _
  $region5: #{positionwise_feed_forward.1} parent=0 // pred_fallthru
    _
  // Predicated region
  $region6: #{positionwise_feed_forward.1} parent=0 // pred_check
    _
  $region7: #{positionwise_feed_forward.1} parent=0 // pred_check_branch
    %13 = sbr.rel (0) target = $region9
  $region8: #{positionwise_feed_forward.1} parent=0 // pred_region
    _
  $region9: #{positionwise_feed_forward.1} parent=0 // pred_fallthru
    _
  // Predicated region
  $region10: #{positionwise_feed_forward.1} parent=0 // pred_check
    _
  $region11: #{positionwise_feed_forward.1} parent=0 // pred_check_branch
    %15 = sbr.rel (0) target = $region13
  $region12: #{positionwise_feed_forward.1} parent=0 // pred_region
    _
  $region13: #{positionwise_feed_forward.1} parent=0 // pred_fallthru
    _
  // Predicated region
  $region14: #{positionwise_feed_forward.1} parent=0 // pred_check
    _
  $region15: #{positionwise_feed_forward.1} parent=0 // pred_check_branch
    %17 = sbr.rel (0) target = $region17
  $region16: #{positionwise_feed_forward.1} parent=0 // pred_region
    _
  $region17: #{positionwise_feed_forward.1} parent=0 // pred_fallthru
    _
  // Predicated region
  $region18: #{positionwise_feed_forward.1} parent=0 // pred_check
    _
  $region19: #{positionwise_feed_forward.1} parent=0 // pred_check_branch
    %19 = sbr.rel (0) target = $region21
  $region20: #{positionwise_feed_forward.1} parent=0 // pred_region
    _
  $region21: #{positionwise_feed_forward.1} parent=0 // pred_fallthru
    _
  %p21 = scmp.eq.s32.totalorder 0, 0
  // Predicated region
  $region22: #{positionwise_feed_forward.1} parent=0 // pred_check
    %p22 = pneg %p21
  $region23: #{positionwise_feed_forward.1} parent=0 // pred_check_branch
    %24 = sbr.rel (%p22) target = $region25
  $region24: #{positionwise_feed_forward.1} parent=0 // pred_region
    %25 = vst [vmem:[#allocation2] sm:$0xff] 0.0
    %26 = vst [vmem:[#allocation2 + $0x8] sm:$0xff] 0.0
  $region25: #{positionwise_feed_forward.1} parent=0 // pred_fallthru
    _
  %v27 = vld [vmem:[%s0] sm:$0xf]
  %v28 = vld [vmem:[%s0 + $0x4] sm:$0xf]
  %v29 = vld [vmem:[%s1] sm:$0xf]
  %v30 = vld [vmem:[%s1 + $0x4] sm:$0xf]
  %v31 = vld [vmem:[%s1 + $0x8] sm:$0xf]
  %v32 = vld [vmem:[%s1 + $0xc] sm:$0xf]
  %v33 = vld [vmem:[%s1 + $0x10] sm:$0xf]
  %v34 = vld [vmem:[%s1 + $0x14] sm:$0xf]
  %v35 = vld [vmem:[%s1 + $0x18] sm:$0xf]
  %v36 = vld [vmem:[%s1 + $0x1c] sm:$0xf]
  %v37 = vld [vmem:[%s1 + $0x20] sm:$0xf]
  %v38 = vld [vmem:[%s1 + $0x24] sm:$0xf]
  %v39 = vld [vmem:[%s1 + $0x28] sm:$0xf]
  %v40 = vld [vmem:[%s1 + $0x2c] sm:$0xf]
  %v41 = vld [vmem:[%s1 + $0x30] sm:$0xf]
  %v42 = vld [vmem:[%s1 + $0x34] sm:$0xf]
  %v43 = vld [vmem:[%s1 + $0x38] sm:$0xf]
  %v44 = vld [vmem:[%s1 + $0x3c] sm:$0xf]
  %v45 = vld [vmem:[%s2] sm:$0x1]
  %v47 = vlaneseq
  %v48 = vshrl.u32 %v47, 7
  %v49 = vsub.s32 0, %v48
  %v50 = vrot.slane %v45, %v49
  %v54 = vunpack.c.l.b16 %v27
  %v55 = vunpack.c.l.b16 %v28
  %v56 = vpack.c.b16 %v55, %v54
  %v74 = vunpack.c.l.b16 %v29
  %v75 = vunpack.c.l.b16 %v30
  %v76 = vunpack.c.l.b16 %v31
  %v77 = vunpack.c.l.b16 %v32
  %v78 = vunpack.c.l.b16 %v33
  %v79 = vunpack.c.l.b16 %v34
  %v80 = vunpack.c.l.b16 %v35
  %v81 = vunpack.c.l.b16 %v36
  %v82 = vunpack.c.l.b16 %v37
  %v83 = vunpack.c.l.b16 %v38
  %v84 = vunpack.c.l.b16 %v39
  %v85 = vunpack.c.l.b16 %v40
  %v86 = vunpack.c.l.b16 %v41
  %v87 = vunpack.c.l.b16 %v42
  %v88 = vunpack.c.l.b16 %v43
  %v89 = vunpack.c.l.b16 %v44
  %v90 = vpack.c.b16 %v75, %v74
  %v91 = vpack.c.b16 %v77, %v76
  %v92 = vpack.c.b16 %v79, %v78
  %v93 = vpack.c.b16 %v81, %v80
  %v94 = vpack.c.b16 %v83, %v82
  %v95 = vpack.c.b16 %v85, %v84
  %v96 = vpack.c.b16 %v87, %v86
  %v97 = vpack.c.b16 %v89, %v88
  %106 = vmatprep.subr.bf16.mxu0 0
  %107 = vmatpush1.bf16.msra.mxu0 %v97
  %108 = vmatprep.subr.bf16.mxu0 0
  %109 = vmatpush1.bf16.msra.mxu0 %v96
  %110 = vmatprep.subr.bf16.mxu0 0
  %111 = vmatpush1.bf16.msra.mxu0 %v95
  %112 = vmatprep.subr.bf16.mxu0 0
  %113 = vmatpush1.bf16.msra.mxu0 %v94
  %114 = vmatprep.subr.bf16.mxu0 0
  %115 = vmatpush1.bf16.msra.mxu0 %v93
  %116 = vmatprep.subr.bf16.mxu0 0
  %117 = vmatpush1.bf16.msra.mxu0 %v92
  %118 = vmatprep.subr.bf16.mxu0 0
  %119 = vmatpush1.bf16.msra.mxu0 %v91
  %120 = vmatprep.subr.bf16.mxu0 0
  %121 = vmatpush1.bf16.msra.mxu0 %v90
  %122 = vmatprep.subr.bf16.mxu0 0
  %123 = vmatpush2.bf16.msra.mxu0 0
  %124 = vmatprep.subr.bf16.mxu0 0
  %125 = vmatpush2.bf16.msra.mxu0 0
  %126 = vmatprep.subr.bf16.mxu0 0
  %127 = vmatpush2.bf16.msra.mxu0 0
  %128 = vmatprep.subr.bf16.mxu0 0
  %129 = vmatpush2.bf16.msra.mxu0 0
  %130 = vmatprep.subr.bf16.mxu0 0
  %131 = vmatpush2.bf16.msra.mxu0 0
  %132 = vmatprep.subr.bf16.mxu0 0
  %133 = vmatpush2.bf16.msra.mxu0 0
  %134 = vmatprep.subr.bf16.mxu0 0
  %135 = vmatpush2.bf16.msra.mxu0 0
  %136 = vmatprep.subr.bf16.mxu0 0
  %137 = vmatpush2.bf16.msra.mxu0 0
  %138 = vmatprep.mubr.bf16.mxu0 0
  %139 = vmatmul.mubr.bf16.gmra.mxu0 %v56
  %v140 = vpop.f32.mrf.mxu0
  %v141 = vadd.f32 %v50, %v140
  %v142 = vpop.f32.mrf.mxu0
  %v143 = vpop.f32.mrf.mxu0
  %v144 = vadd.f32 %v50, %v143
  %v145 = vpop.f32.mrf.mxu0
  %146 = vdwg.mxu0
  %v147 = vmax.f32 %v141, 0.0
  %v148 = vmax.f32 %v144, 0.0
  %v149 = vld [vmem:[#allocation2] sm:$0xff]
  %v150 = vld [vmem:[#allocation2 + $0x8] sm:$0xff]
  %v151 = vpack.c.bf16 %v148, %v147
  %v152 = vld [vmem:[%s3] sm:$0xf]
  %v153 = vld [vmem:[%s3 + $0x4] sm:$0xf]
  %v154 = vld [vmem:[%s3 + $0x8] sm:$0xf]
  %v155 = vld [vmem:[%s3 + $0xc] sm:$0xf]
  %v156 = vld [vmem:[%s3 + $0x10] sm:$0xf]
  %v157 = vld [vmem:[%s3 + $0x14] sm:$0xf]
  %v158 = vld [vmem:[%s3 + $0x18] sm:$0xf]
  %v159 = vld [vmem:[%s3 + $0x1c] sm:$0xf]
  %v160 = vld [vmem:[%s3 + $0x20] sm:$0xf]
  %v161 = vld [vmem:[%s3 + $0x24] sm:$0xf]
  %v162 = vld [vmem:[%s3 + $0x28] sm:$0xf]
  %v163 = vld [vmem:[%s3 + $0x2c] sm:$0xf]
  %v164 = vld [vmem:[%s3 + $0x30] sm:$0xf]
  %v165 = vld [vmem:[%s3 + $0x34] sm:$0xf]
  %v166 = vld [vmem:[%s3 + $0x38] sm:$0xf]
  %v167 = vld [vmem:[%s3 + $0x3c] sm:$0xf]
  %v184 = vunpack.c.l.b16 %v152
  %v185 = vunpack.c.l.b16 %v153
  %v186 = vunpack.c.l.b16 %v154
  %v187 = vunpack.c.l.b16 %v155
  %v188 = vunpack.c.l.b16 %v156
  %v189 = vunpack.c.l.b16 %v157
  %v190 = vunpack.c.l.b16 %v158
  %v191 = vunpack.c.l.b16 %v159
  %v192 = vunpack.c.l.b16 %v160
  %v193 = vunpack.c.l.b16 %v161
  %v194 = vunpack.c.l.b16 %v162
  %v195 = vunpack.c.l.b16 %v163
  %v196 = vunpack.c.l.b16 %v164
  %v197 = vunpack.c.l.b16 %v165
  %v198 = vunpack.c.l.b16 %v166
  %v199 = vunpack.c.l.b16 %v167
  %v200 = vpack.c.b16 %v185, %v184
  %v201 = vpack.c.b16 %v187, %v186
  %v202 = vpack.c.b16 %v189, %v188
  %v203 = vpack.c.b16 %v191, %v190
  %v204 = vpack.c.b16 %v193, %v192
  %v205 = vpack.c.b16 %v195, %v194
  %v206 = vpack.c.b16 %v197, %v196
  %v207 = vpack.c.b16 %v199, %v198
  %216 = vmatprep.subr.bf16.mxu0 0
  %217 = vmatpush1.bf16.msra.mxu0 %v207
  %218 = vmatprep.subr.bf16.mxu0 0
  %219 = vmatpush1.bf16.msra.mxu0 %v206
  %220 = vmatprep.subr.bf16.mxu0 0
  %221 = vmatpush1.bf16.msra.mxu0 %v205
  %222 = vmatprep.subr.bf16.mxu0 0
  %223 = vmatpush1.bf16.msra.mxu0 %v204
  %224 = vmatprep.subr.bf16.mxu0 0
  %225 = vmatpush1.bf16.msra.mxu0 %v203
  %226 = vmatprep.subr.bf16.mxu0 0
  %227 = vmatpush1.bf16.msra.mxu0 %v202
  %228 = vmatprep.subr.bf16.mxu0 0
  %229 = vmatpush1.bf16.msra.mxu0 %v201
  %230 = vmatprep.subr.bf16.mxu0 0
  %231 = vmatpush1.bf16.msra.mxu0 %v200
  %232 = vmatprep.subr.bf16.mxu0 0
  %233 = vmatpush2.bf16.msra.mxu0 0
  %234 = vmatprep.subr.bf16.mxu0 0
  %235 = vmatpush2.bf16.msra.mxu0 0
  %236 = vmatprep.subr.bf16.mxu0 0
  %237 = vmatpush2.bf16.msra.mxu0 0
  %238 = vmatprep.subr.bf16.mxu0 0
  %239 = vmatpush2.bf16.msra.mxu0 0
  %240 = vmatprep.subr.bf16.mxu0 0
  %241 = vmatpush2.bf16.msra.mxu0 0
  %242 = vmatprep.subr.bf16.mxu0 0
  %243 = vmatpush2.bf16.msra.mxu0 0
  %244 = vmatprep.subr.bf16.mxu0 0
  %245 = vmatpush2.bf16.msra.mxu0 0
  %246 = vmatprep.subr.bf16.mxu0 0
  %247 = vmatpush2.bf16.msra.mxu0 0
  %248 = vmatprep.mubr.bf16.mxu0 0
  %249 = vmatmul.mubr.bf16.gmra.mxu0 %v151
  %v250 = vpop.f32.mrf.mxu0
  %v251 = vadd.f32 0.0, %v250
  %v252 = vpop.f32.mrf.mxu0
  %v253 = vpop.f32.mrf.mxu0
  %v254 = vadd.f32 0.0, %v253
  %v255 = vpop.f32.mrf.mxu0
  %256 = vdwg.mxu0
  %v257 = vadd.f32 %v149, %v251
  %v258 = vadd.f32 %v150, %v254
  %259 = vst [vmem:[#allocation2] sm:$0xff] %v257
  %260 = vst [vmem:[#allocation2 + $0x8] sm:$0xff] %v258
  // Predicated region
  $region26: #{positionwise_feed_forward.1} parent=0 // pred_check
    %p261 = pneg %p21
  $region27: #{positionwise_feed_forward.1} parent=0 // pred_check_branch
    %263 = sbr.rel (%p261) target = $region29
  $region28: #{positionwise_feed_forward.1} parent=0 // pred_region
    %v264 = vld [vmem:[#allocation2] sm:$0xff]
    %v265 = vld [vmem:[#allocation2 + $0x8] sm:$0xff]
    %v266 = vld [vmem:[%s4] sm:$0x1]
    %v268 = vlaneseq
    %v269 = vshrl.u32 %v268, 7
    %v270 = vsub.s32 0, %v269
    %v271 = vrot.slane %v266, %v270
    %v273 = vadd.f32 %v264, %v271
    %v274 = vadd.f32 %v265, %v271
    %275 = vst [vmem:[%s5] sm:$0xff] %v273
    %276 = vst [vmem:[%s5 + $0x8] sm:$0xff] %v274
  $region29: #{positionwise_feed_forward.1} parent=0 // pred_fallthru
    _
  // Predicated region
  $region30: #{positionwise_feed_forward.1} parent=0 // pred_check
    _
  $region31: #{positionwise_feed_forward.1} parent=0 // pred_check_branch
    %278 = sbr.rel (0) target = $region33
  $region32: #{positionwise_feed_forward.1} parent=0 // pred_region
    _
  $region33: #{positionwise_feed_forward.1} parent=0 // pred_fallthru
    _
  // Predicated region
  $region34: #{positionwise_feed_forward.1} parent=0 // pred_check
    _
  $region35: #{positionwise_feed_forward.1} parent=0 // pred_check_branch
    %280 = sbr.rel (0) target = $region37
  $region36: #{positionwise_feed_forward.1} parent=0 // pred_region
    _
  $region37: #{positionwise_feed_forward.1} parent=0 // pred_fallthru
    _

</llo_original>
